<compile_context>
chip_gen: v7x
topology: tpu7x:2x2x1
jax: 0.10.0
libtpu: 0.0.40
codegen_flags: <defaults>
</compile_context>

<pallas_src>
import functools

import jax
import jax.numpy as jnp
from jax.experimental import pallas as pl
from jax.experimental.pallas import tpu as pltpu

# ---- small, module-consistent hyper-parameters -----------------------------
T_STEPS = 4          # num_steps (spiking time steps)
BATCH   = 2          # B
MAX_LEN = 16         # max_length  (c_in of value_embedding)
N_VARS  = 4          # C : number of variates / inverted tokens
DIM     = 256        # d_model  (kept a multiple of 128 -> lane-dense output)
TILE_D  = 128        # d_model tile per grid step

TAU     = 2.0        # LIF tau
V_TH    = 1.0        # LIFNode default v_threshold (v_reset = 0 -> hard reset)
BN_EPS  = 1e-5       # BatchNorm1d default eps

SPIKE_DTYPE = jnp.bfloat16   # 0/1 exact; use int8 instead if targeting v5e/v6e
                             # integer-MXU downstream matmuls.


# ---------------------------------------------------------------------------
# Fused kernel: value_embedding (matmul) -> BatchNorm1d (train stats) ->
#               multi-step LIF, one d_model tile per grid step.
# ---------------------------------------------------------------------------
def _emb_kernel(x_ref, w_ref, o_ref, *, t_steps, tau, v_th):
    """x_ref: (N, L)     bf16, rows ordered (b, c) — single copy, NOT repeated over T
       w_ref: (L, Td)    bf16, value_embedding.weight^T tile (Td = TILE_D lanes)
       o_ref: (T*N, Td)  spikes, rows ordered (t, b, c), lane-dense (Td % 128 == 0)
    """
    # Linear(max_length -> d_model) on the MXU; bf16 operands, f32 accumulation.
    # (Bias omitted: the BatchNorm below has beta=0 and subtracts the per-channel
    #  mean, so a per-channel constant offset cancels exactly.)
    y = jnp.dot(x_ref[...], w_ref[...], preferred_element_type=jnp.float32)

    # BatchNorm1d(d_model), training-mode batch stats, gamma=1 / beta=0, biased
    # variance.  PyTorch computes per-channel stats over all (T*B, C) positions;
    # since the (placeholder) encoder repeats the input exactly over T, stats over
    # the B*C de-duplicated rows are identical.
    n = y.shape[0]
    mean = jnp.sum(y, axis=0, keepdims=True) * (1.0 / n)
    diff = y - mean
    var = jnp.sum(diff * diff, axis=0, keepdims=True) * (1.0 / n)
    ybn = diff * jax.lax.rsqrt(var + BN_EPS)                      # f32, rsqrt on EUP

    # Multi-step LIF (spikingjelly LIFNode: tau=2, decay_input=True, v_threshold=1,
    # v_reset=0 -> hard reset).  Same input every step (pure-repeat encoder); the
    # membrane state carries across steps.  ATan surrogate / detach_reset only
    # affect the backward pass; the forward is a Heaviside.
    inv_tau = 1.0 / tau
    v = jnp.zeros_like(ybn)
    spikes = []
    for _ in range(t_steps):                        # static unroll (T known)
        v = v + (ybn - v) * inv_tau                 # charge (v_reset == 0)
        fired = v >= v_th                           # single compare per step
        spikes.append(fired.astype(jnp.float32))    # fire
        v = jnp.where(fired, 0.0, v)                # hard reset (mask reused)
    # One lane/sublane-dense store of the whole (T*N, Td) block.
    o_ref[...] = jnp.concatenate(spikes, axis=0).astype(o_ref.dtype)


def data_embedding_inverted(x_rows, w, *, t_steps=T_STEPS):
    """x_rows: (B*C, L) float32 (rows ordered (b, c))
       w:      (L, D)   float32 (value_embedding.weight^T)
       returns spikes (T*B*C, D) SPIKE_DTYPE, rows ordered (t, b, c)."""
    N, L = x_rows.shape
    L2, D = w.shape
    assert L2 == L and D % TILE_D == 0 and N % 8 == 0

    x_bf = x_rows.astype(jnp.bfloat16)              # half the input DMA bytes
    w_bf = w.astype(jnp.bfloat16)

    kernel = functools.partial(_emb_kernel, t_steps=t_steps, tau=TAU, v_th=V_TH)
    return pl.pallas_call(
        kernel,
        out_shape=jax.ShapeDtypeStruct((t_steps * N, D), SPIKE_DTYPE),
        grid=(D // TILE_D,),                        # independent d_model tiles
        in_specs=[
            pl.BlockSpec((N, L), lambda j: (0, 0)),        # same rows every step
            pl.BlockSpec((L, TILE_D), lambda j: (0, j)),   # weight tile per step
        ],
        out_specs=pl.BlockSpec((t_steps * N, TILE_D), lambda j: (0, j)),
        compiler_params=pltpu.CompilerParams(
            dimension_semantics=("parallel",),      # megacore-shardable on v7x
            vmem_limit_bytes=32 * 1024 * 1024,
        ),
    )(x_bf, w_bf)


# ---------------------------------------------------------------------------
# iSpikformer forward (use_cluster=False default path)
# ---------------------------------------------------------------------------
def ispikformer_forward(x, params):
    """x: (B, L, C) float32.  Returns (out, out) with out: (B, C, dim) float32."""
    B, L, C = x.shape
    # functional.reset_net(...): all neuron state is local to the kernel -> no-op.

    # TODO(synk): SpikeEncoder['spikingjelly']['conv'] is not defined in the provided
    # source; the placeholder encoder repeats x over the T time steps.  Because that
    # repeat is exact, the (T, B, C, L) tensor is never materialized: the fused
    # kernel computes Linear+BN once and unrolls the T-step LIF internally.
    x_rows = jnp.transpose(x, (0, 2, 1)).reshape(B * C, L)     # rows ordered (b, c)

    spikes2d = data_embedding_inverted(x_rows, params["w_emb"])  # (T*B*C, D)
    D = params["w_emb"].shape[1]
    spikes = spikes2d.reshape(T_STEPS, B, C, D)

    # TODO(synk): Block (spiking self-attention, depths=2) is not defined in the
    # provided source; treated as identity.
    out = spikes[-1].astype(jnp.float32)                        # x[-1] -> (B, C, dim)
    return out, out


def init_params(key):
    # nn.Linear(max_length, dim): weight ~ N(0, 0.02) per _init_weights.  The bias
    # (init 0, and exactly cancelled by the following BatchNorm) is dropped.
    w = 0.02 * jax.random.normal(key, (MAX_LEN, DIM), dtype=jnp.float32)  # W^T
    return {"w_emb": w}


if __name__ == "__main__":
    key = jax.random.PRNGKey(0)
    k_x, k_w = jax.random.split(key)
    x = jax.random.normal(k_x, (BATCH, MAX_LEN, N_VARS), dtype=jnp.float32)
    params = init_params(k_w)

    out, out2 = jax.jit(ispikformer_forward)(x, params)
    jax.block_until_ready(out)
    jax.block_until_ready(out2)

    assert out.shape == (BATCH, N_VARS, DIM), out.shape
    assert out.dtype == jnp.float32
    assert bool(jnp.all((out == 0.0) | (out == 1.0)))   # spikes are binary
    print("KERNEL_OK")
</pallas_src>

<mosaic_0001>
module attributes {stable_mosaic.version = 11 : i64} {
  func.func @_emb_kernel(%arg0: i32, %arg1: memref<8x16xbf16, #tpu.memory_space<vmem>>, %arg2: memref<16x128xbf16, #tpu.memory_space<vmem>>, %arg3: memref<32x128xbf16, #tpu.memory_space<vmem>>) attributes {dimension_semantics = [#tpu.dimension_semantics<parallel>], iteration_bounds = array<i64: 2>, scalar_prefetch = 0 : i64, scratch_operands = 0 : i64, tpu.core_type = #tpu.core_type<tc>, window_params = [{pipeline_mode = #tpu.pipeline_mode<synchronous>, transform_indices = @transform_0, window_bounds = array<i64: 8, 16>}, {transform_indices = @transform_1, window_bounds = array<i64: 16, 128>}, {transform_indices = @transform_2, window_bounds = array<i64: 32, 128>}]} {
    %c0 = arith.constant 0 : index
    %c0_0 = arith.constant 0 : index
    %0 = vector.load %arg1[%c0, %c0_0] : memref<8x16xbf16, #tpu.memory_space<vmem>>, vector<8x16xbf16>
    %c0_1 = arith.constant 0 : index
    %c0_2 = arith.constant 0 : index
    %1 = vector.load %arg2[%c0_1, %c0_2] : memref<16x128xbf16, #tpu.memory_space<vmem>>, vector<16x128xbf16>
    %cst = arith.constant dense<0.000000e+00> : vector<8x128xf32>
    %2 = tpu.matmul %0, %1, %cst {dimension_numbers = #tpu.dot_dimension_numbers<[1], [0], [0], [1], [0, 0, 1, 1], [], []>} : vector<8x16xbf16>, vector<16x128xbf16>, vector<8x128xf32> -> vector<8x128xf32>
    %cst_3 = arith.constant dense<0.000000e+00> : vector<128xf32>
    %3 = vector.multi_reduction <add>, %2, %cst_3 [0] : vector<8x128xf32> to vector<128xf32>
    %4 = vector.shape_cast %3 : vector<128xf32> to vector<1x128xf32>
    %cst_4 = arith.constant 1.250000e-01 : f32
    %5 = vector.broadcast %cst_4 : f32 to vector<1x128xf32>
    %6 = arith.mulf %4, %5 : vector<1x128xf32>
    %7 = vector.broadcast %6 : vector<1x128xf32> to vector<8x128xf32>
    %8 = arith.subf %2, %7 : vector<8x128xf32>
    %9 = arith.mulf %8, %8 : vector<8x128xf32>
    %cst_5 = arith.constant dense<0.000000e+00> : vector<128xf32>
    %10 = vector.multi_reduction <add>, %9, %cst_5 [0] : vector<8x128xf32> to vector<128xf32>
    %11 = vector.shape_cast %10 : vector<128xf32> to vector<1x128xf32>
    %cst_6 = arith.constant 1.250000e-01 : f32
    %12 = vector.broadcast %cst_6 : f32 to vector<1x128xf32>
    %13 = arith.mulf %11, %12 : vector<1x128xf32>
    %cst_7 = arith.constant 9.99999974E-6 : f32
    %14 = vector.broadcast %cst_7 : f32 to vector<1x128xf32>
    %15 = arith.addf %13, %14 : vector<1x128xf32>
    %16 = math.rsqrt %15 : vector<1x128xf32>
    %17 = vector.broadcast %16 : vector<1x128xf32> to vector<8x128xf32>
    %18 = arith.mulf %8, %17 : vector<8x128xf32>
    %cst_8 = arith.constant 0.000000e+00 : f32
    %19 = vector.broadcast %cst_8 : f32 to vector<8x128xf32>
    %20 = arith.subf %18, %19 : vector<8x128xf32>
    %cst_9 = arith.constant 5.000000e-01 : f32
    %21 = vector.broadcast %cst_9 : f32 to vector<8x128xf32>
    %22 = arith.mulf %20, %21 : vector<8x128xf32>
    %23 = arith.addf %19, %22 : vector<8x128xf32>
    %cst_10 = arith.constant 1.000000e+00 : f32
    %24 = vector.broadcast %cst_10 : f32 to vector<8x128xf32>
    %25 = arith.cmpf oge, %23, %24 : vector<8x128xf32>
    %26 = arith.extui %25 : vector<8x128xi1> to vector<8x128xi32>
    %27 = arith.sitofp %26 : vector<8x128xi32> to vector<8x128xf32>
    %cst_11 = arith.constant 0.000000e+00 : f32
    %28 = vector.broadcast %cst_11 : f32 to vector<8x128xf32>
    %29 = arith.select %25, %28, %23 : vector<8x128xi1>, vector<8x128xf32>
    %30 = arith.subf %18, %29 : vector<8x128xf32>
    %cst_12 = arith.constant 5.000000e-01 : f32
    %31 = vector.broadcast %cst_12 : f32 to vector<8x128xf32>
    %32 = arith.mulf %30, %31 : vector<8x128xf32>
    %33 = arith.addf %29, %32 : vector<8x128xf32>
    %cst_13 = arith.constant 1.000000e+00 : f32
    %34 = vector.broadcast %cst_13 : f32 to vector<8x128xf32>
    %35 = arith.cmpf oge, %33, %34 : vector<8x128xf32>
    %36 = arith.extui %35 : vector<8x128xi1> to vector<8x128xi32>
    %37 = arith.sitofp %36 : vector<8x128xi32> to vector<8x128xf32>
    %cst_14 = arith.constant 0.000000e+00 : f32
    %38 = vector.broadcast %cst_14 : f32 to vector<8x128xf32>
    %39 = arith.select %35, %38, %33 : vector<8x128xi1>, vector<8x128xf32>
    %40 = arith.subf %18, %39 : vector<8x128xf32>
    %cst_15 = arith.constant 5.000000e-01 : f32
    %41 = vector.broadcast %cst_15 : f32 to vector<8x128xf32>
    %42 = arith.mulf %40, %41 : vector<8x128xf32>
    %43 = arith.addf %39, %42 : vector<8x128xf32>
    %cst_16 = arith.constant 1.000000e+00 : f32
    %44 = vector.broadcast %cst_16 : f32 to vector<8x128xf32>
    %45 = arith.cmpf oge, %43, %44 : vector<8x128xf32>
    %46 = arith.extui %45 : vector<8x128xi1> to vector<8x128xi32>
    %47 = arith.sitofp %46 : vector<8x128xi32> to vector<8x128xf32>
    %cst_17 = arith.constant 0.000000e+00 : f32
    %48 = vector.broadcast %cst_17 : f32 to vector<8x128xf32>
    %49 = arith.select %45, %48, %43 : vector<8x128xi1>, vector<8x128xf32>
    %50 = arith.subf %18, %49 : vector<8x128xf32>
    %cst_18 = arith.constant 5.000000e-01 : f32
    %51 = vector.broadcast %cst_18 : f32 to vector<8x128xf32>
    %52 = arith.mulf %50, %51 : vector<8x128xf32>
    %53 = arith.addf %49, %52 : vector<8x128xf32>
    %cst_19 = arith.constant 1.000000e+00 : f32
    %54 = vector.broadcast %cst_19 : f32 to vector<8x128xf32>
    %55 = arith.cmpf oge, %53, %54 : vector<8x128xf32>
    %56 = arith.extui %55 : vector<8x128xi1> to vector<8x128xi32>
    %57 = arith.sitofp %56 : vector<8x128xi32> to vector<8x128xf32>
    %58 = tpu.concatenate %27, %37, %47, %57 in 0 : vector<8x128xf32>, vector<8x128xf32>, vector<8x128xf32>, vector<8x128xf32> -> vector<32x128xf32>
    %59 = arith.truncf %58 : vector<32x128xf32> to vector<32x128xbf16>
    %c0_20 = arith.constant 0 : index
    %c0_21 = arith.constant 0 : index
    %60 = vector.load %arg3[%c0_20, %c0_21] : memref<32x128xbf16, #tpu.memory_space<vmem>>, vector<32x128xbf16>
    tpu.vector_store %arg3[%c0_20, %c0_21], %59 {strides = array<i32>} : memref<32x128xbf16, #tpu.memory_space<vmem>>, vector<32x128xbf16>,
    return
  }
  func.func @transform_0(%arg0: i32) -> (i32, i32) {
    %c0_i32 = arith.constant 0 : i32
    %c0_i32_0 = arith.constant 0 : i32
    %c0_i32_1 = arith.constant 0 : i32
    return %c0_i32, %c0_i32_0 : i32, i32
  }
  func.func @transform_1(%arg0: i32) -> (i32, i32) {
    %c0_i32 = arith.constant 0 : i32
    %c0_i32_0 = arith.constant 0 : i32
    return %c0_i32, %arg0 : i32, i32
  }
  func.func @transform_2(%arg0: i32) -> (i32, i32) {
    %c0_i32 = arith.constant 0 : i32
    %c0_i32_0 = arith.constant 0 : i32
    return %c0_i32, %arg0 : i32, i32
  }
}

</mosaic_0001>

<llo_original>
// kernel: ispikformer_forward.1
$region0: #{ispikformer_forward.1}
  #allocation0 [shape = 'u32[]', space=smem, size = 0x4, offset = 0x4, fixed_abs, tag = 'smem constant byte address 0x4 - core index']
  #allocation1 [shape = 'u32[144,128]{1,0:T(1,128)}', space=vmem, size = 0x12000, scoped, tag = 'internal scratch']
  %s0 = inlined_call_operand.vmem [shape: bf16[8,16], index: 0, kind: input, shape index: {}]
  %s1 = inlined_call_operand.vmem [shape: bf16[16,256], index: 1, kind: input, shape index: {}]
  %s2 = inlined_call_operand.vmem [shape: bf16[32,256], index: 2, kind: output, shape index: {}]
  %s3 = sld [smem:[#allocation0]]
  $region119: #{ispikformer_forward.1} parent=0
    _
  %s5 = ssub.s32 1, %s3
  %s6 = scalar_select 0, %s5, %s3
  $region1: #{ispikformer_forward.1} parent=0
    #allocation2 [shape = 'u8[8192]{0}', space=vmem, size = 0x2000, scoped, tag = 'input window, operand 1']
    #allocation3 [shape = 'u8[16384]{0}', space=vmem, size = 0x4000, scoped, tag = 'output window, operand 0']
    loop: start=0, step=1, limit=4
    $region2: #{ispikformer_forward.1} parent=1 // loop_pre_header
      _
    $region3: #{ispikformer_forward.1} parent=1 // loop_header
      %s8 = sphi 0, %s12
      %p9 = scmp.ge.s32.totalorder %s8, 4
      %s16 = sphi 0, %s16
      %s18 = sphi 0, %s16
      %s19 = sphi 0, %s18
      %s33 = sphi 0, %s19
      %s39 = sphi 0, %s41
      %s42 = sphi 0, %s39
      %s43 = sphi 0, %s42
      %s59 = sphi 0, %s43
      %s65 = sphi 0, %s67
      %s68 = sphi 0, %s65
      %s69 = sphi 0, %s68
      %s85 = sphi 0, %s69
    $region4: #{ispikformer_forward.1} parent=1 // loop_header_branch
      %11 = sbr.rel (%p9) target = $region8
    $region5: #{ispikformer_forward.1} parent=1 // loop_body
      %s13 = ssub.s32 %s8, 1
      %s14 = ssub.s32 %s8, 2
      %s15 = sadd.s32 %s8, 1
      %s17 = sadd.s32 %s16, 1
      %p20 = scmp.eq.s32.totalorder %s8, 1
      %p21 = scmp.ne.s32.totalorder %s16, %s18
      %p22 = scmp.eq.s32.totalorder %s8, 0
      %p23 = por %p21, %p22
      %p24 = scmp.ne.s32.totalorder %s16, %s18
      %p25 = scmp.eq.s32.totalorder %s13, 1
      %p26 = por %p24, %p25
      %p27 = scmp.ne.s32.totalorder %s18, %s19
      %p28 = scmp.eq.s32.totalorder %s13, 0
      %p29 = por %p27, %p28
      %p30 = scmp.ne.s32.totalorder %s18, %s19
      %p31 = scmp.eq.s32.totalorder %s14, 1
      %p32 = por %p30, %p31
      %p34 = scmp.ne.s32.totalorder %s19, %s33
      %p35 = scmp.eq.s32.totalorder %s14, 0
      %p36 = por %p34, %p35
      %s37 = ssub.s32 %s8, %s15
      %p38 = scmp.eq.s32.totalorder %s37, 0
      %s40 = sadd.s32 %s39, 1
      %s41 = scalar_select %p38, %s39, %s40
      %p44 = pneg %p38
      %p45 = scmp.eq.s32.totalorder %s8, 1
      %p46 = por %p44, %p45
      %p47 = scmp.ne.s32.totalorder %s39, %s42
      %p48 = scmp.eq.s32.totalorder %s8, 0
      %p49 = por %p47, %p48
      %p50 = scmp.ne.s32.totalorder %s39, %s42
      %p51 = scmp.eq.s32.totalorder %s13, 1
      %p52 = por %p50, %p51
      %p53 = scmp.ne.s32.totalorder %s42, %s43
      %p54 = scmp.eq.s32.totalorder %s13, 0
      %p55 = por %p53, %p54
      %p56 = scmp.ne.s32.totalorder %s42, %s43
      %p57 = scmp.eq.s32.totalorder %s14, 1
      %p58 = por %p56, %p57
      %p60 = scmp.ne.s32.totalorder %s43, %s59
      %p61 = scmp.eq.s32.totalorder %s14, 0
      %p62 = por %p60, %p61
      %s63 = ssub.s32 %s8, %s15
      %p64 = scmp.eq.s32.totalorder %s63, 0
      %s66 = sadd.s32 %s65, 1
      %s67 = scalar_select %p64, %s65, %s66
      %p70 = pneg %p64
      %p71 = scmp.eq.s32.totalorder %s8, 1
      %p72 = por %p70, %p71
      %p73 = scmp.ne.s32.totalorder %s65, %s68
      %p74 = scmp.eq.s32.totalorder %s8, 0
      %p75 = por %p73, %p74
      %p76 = scmp.ne.s32.totalorder %s65, %s68
      %p77 = scmp.eq.s32.totalorder %s13, 1
      %p78 = por %p76, %p77
      %p79 = scmp.ne.s32.totalorder %s68, %s69
      %p80 = scmp.eq.s32.totalorder %s13, 0
      %p81 = por %p79, %p80
      %p82 = scmp.ne.s32.totalorder %s68, %s69
      %p83 = scmp.eq.s32.totalorder %s14, 1
      %p84 = por %p82, %p83
      %p86 = scmp.ne.s32.totalorder %s69, %s85
      %p87 = scmp.eq.s32.totalorder %s14, 0
      %p88 = por %p86, %p87
      %p89 = scmp.le.s32.totalorder 1, %s8
      %p90 = scmp.lt.s32.totalorder %s8, 3
      %p91 = pnand %p89, %p90
      %p92 = pneg %p91
      // Predicated region
      $region9: #{ispikformer_forward.1} parent=5 // pred_check
        _
      $region10: #{ispikformer_forward.1} parent=5 // pred_check_branch
        %94 = sbr.rel (%p91) target = $region12
      $region11: #{ispikformer_forward.1} parent=5 // pred_region
        %s95 = ssub.s32 %s8, 1
        // Predicated region
        $region13: #{ispikformer_forward.1} parent=11 // pred_check
          %p96 = pneg %p29
        $region14: #{ispikformer_forward.1} parent=11 // pred_check_branch
          %98 = sbr.rel (%p96) target = $region16
        $region15: #{ispikformer_forward.1} parent=11 // pred_region
          _
        $region16: #{ispikformer_forward.1} parent=11 // pred_fallthru
          _
      $region12: #{ispikformer_forward.1} parent=5 // pred_fallthru
        _
      %p99 = scmp.lt.s32.totalorder %s8, 2
      // Predicated region
      $region17: #{ispikformer_forward.1} parent=5 // pred_check
        %p100 = pneg %p99
      $region18: #{ispikformer_forward.1} parent=5 // pred_check_branch
        %102 = sbr.rel (%p100) target = $region20
      $region19: #{ispikformer_forward.1} parent=5 // pred_region
        // Predicated region
        $region21: #{ispikformer_forward.1} parent=19 // pred_check
          %p103 = pneg %p49
        $region22: #{ispikformer_forward.1} parent=19 // pred_check_branch
          %105 = sbr.rel (%p103) target = $region24
        $region23: #{ispikformer_forward.1} parent=19 // pred_region
          %s106 = sand.u32 %s39, 1
          %s107 = sand.u32 %s39, 1
          %s108 = smul.addr %s107, 8
          %s109 = scalar_lea.vmem [#allocation2], %s108
          %s110 = smul.addr %s8, 4
          %s111 = scalar_lea.vmem %s1, %s110
          // Predicated region
          $region25: #{ispikformer_forward.1} parent=23 // pred_check
            _
          $region26: #{ispikformer_forward.1} parent=23 // pred_check_branch
            %113 = sbr.rel (0) target = $region28
          $region27: #{ispikformer_forward.1} parent=23 // pred_region
            // Predicated region
            $region29: #{ispikformer_forward.1} parent=27 // pred_check
              _
            $region30: #{ispikformer_forward.1} parent=27 // pred_check_branch
              %115 = sbr.rel target = $region32
            $region31: #{ispikformer_forward.1} parent=27 // pred_region
              // Predicated region
              $region44: #{ispikformer_forward.1} parent=31 // pred_check
                _
              $region45: #{ispikformer_forward.1} parent=31 // pred_check_branch
                %132 = sbr.rel (0) target = $region47
              $region46: #{ispikformer_forward.1} parent=31 // pred_region
                loop: start=0, step=1, limit=1
                $region48: #{ispikformer_forward.1} parent=46 // loop_pre_header
                  _
                $region49: #{ispikformer_forward.1} parent=46 // loop_header
                  %s134 = sphi 0, %s138
                  %p135 = scmp.ge.s32.totalorder %s134, 1
                  %s139 = sphi %s111, %s111
                  %s140 = sphi %s109, %s109
                $region50: #{ispikformer_forward.1} parent=46 // loop_header_branch
                  %137 = sbr.rel (%p135) target = $region54
                $region51: #{ispikformer_forward.1} parent=46 // loop_body
                  _
                $region52: #{ispikformer_forward.1} parent=46 // loop_footer
                  %s138 = sadd.s32 1, %s134
                $region53: #{ispikformer_forward.1} parent=46 // loop_footer_branch
                  %133 = sbr.rel target = $region49
                $region54: #{ispikformer_forward.1} parent=46 // loop_exit
                  _
                loop: start=0, step=1, limit=1
                $region55: #{ispikformer_forward.1} parent=46 // loop_pre_header
                  _
                $region56: #{ispikformer_forward.1} parent=46 // loop_header
                  %s143 = sphi 0, %s147
                  %p144 = scmp.ge.s32.totalorder %s143, 1
                  %s148 = sphi %s111, %s111
                  %s149 = sphi %s109, %s109
                $region57: #{ispikformer_forward.1} parent=46 // loop_header_branch
                  %146 = sbr.rel (%p144) target = $region61
                $region58: #{ispikformer_forward.1} parent=46 // loop_body
                  %v150 = vld [vmem:[%s148] sm:$0xf]
                  %151 = vst [vmem:[%s149] sm:$0xf] %v150
                  %v152 = vld [vmem:[%s148 + $0x8] sm:$0xf]
                  %153 = vst [vmem:[%s149 + $0x4] sm:$0xf] %v152
                $region59: #{ispikformer_forward.1} parent=46 // loop_footer
                  %s147 = sadd.s32 1, %s143
                $region60: #{ispikformer_forward.1} parent=46 // loop_footer_branch
                  %142 = sbr.rel target = $region56
                $region61: #{ispikformer_forward.1} parent=46 // loop_exit
                  _
              $region47: #{ispikformer_forward.1} parent=31 // pred_fallthru
                _
            $region32: #{ispikformer_forward.1} parent=27 // pred_fallthru
              _
            // Predicated region
            $region33: #{ispikformer_forward.1} parent=27 // pred_check
              _
            $region34: #{ispikformer_forward.1} parent=27 // pred_check_branch
              %117 = sbr.rel (0) target = $region36
            $region35: #{ispikformer_forward.1} parent=27 // pred_region
              loop: start=0, step=1, limit=1
              $region37: #{ispikformer_forward.1} parent=35 // loop_pre_header
                _
              $region38: #{ispikformer_forward.1} parent=35 // loop_header
                %s120 = sphi 0, %s124
                %p121 = scmp.ge.s32.totalorder %s120, 1
                %s125 = sphi %s111, %s111
                %s126 = sphi %s109, %s109
              $region39: #{ispikformer_forward.1} parent=35 // loop_header_branch
                %123 = sbr.rel (%p121) target = $region43
              $region40: #{ispikformer_forward.1} parent=35 // loop_body
                %v127 = vld [vmem:[%s125] sm:$0xf]
                %128 = vst [vmem:[%s126] sm:$0xf] %v127
                %v129 = vld [vmem:[%s125 + $0x8] sm:$0xf]
                %130 = vst [vmem:[%s126 + $0x4] sm:$0xf] %v129
              $region41: #{ispikformer_forward.1} parent=35 // loop_footer
                %s124 = sadd.s32 1, %s120
              $region42: #{ispikformer_forward.1} parent=35 // loop_footer_branch
                %119 = sbr.rel target = $region38
              $region43: #{ispikformer_forward.1} parent=35 // loop_exit
                _
            $region36: #{ispikformer_forward.1} parent=27 // pred_fallthru
              _
          $region28: #{ispikformer_forward.1} parent=23 // pred_fallthru
            _
          %154 = vnop
        $region24: #{ispikformer_forward.1} parent=19 // pred_fallthru
          _
      $region20: #{ispikformer_forward.1} parent=5 // pred_fallthru
        _
      %p155 = scmp.le.s32.totalorder 1, %s8
      %p156 = scmp.lt.s32.totalorder %s8, 3
      %p157 = pnand %p155, %p156
      %p158 = pneg %p157
      // Predicated region
      $region62: #{ispikformer_forward.1} parent=5 // pred_check
        _
      $region63: #{ispikformer_forward.1} parent=5 // pred_check_branch
        %160 = sbr.rel (%p157) target = $region65
      $region64: #{ispikformer_forward.1} parent=5 // pred_region
        %s161 = ssub.s32 %s8, 1
        %s162 = sand.u32 %s42, 1
        %s163 = sand.u32 %s42, 1
        %s164 = smul.addr %s163, 8
        %s165 = scalar_lea.vmem [#allocation2], %s164
        // Predicated region
        $region66: #{ispikformer_forward.1} parent=64 // pred_check
          %p166 = pneg %p55
        $region67: #{ispikformer_forward.1} parent=64 // pred_check_branch
          %168 = sbr.rel (%p166) target = $region69
        $region68: #{ispikformer_forward.1} parent=64 // pred_region
          _
        $region69: #{ispikformer_forward.1} parent=64 // pred_fallthru
          _
        %p169 = pneg %p29
        %p170 = pneg %p26
        %s171 = sand.u32 %s42, 1
        %s172 = sand.u32 %s42, 1
        %s173 = smul.addr %s172, 8
        %s174 = scalar_lea.vmem [#allocation2], %s173
        %p175 = pneg %p55
        %p176 = pneg %p52
        %p177 = pneg %p81
        %p178 = pneg %p78
        %s179 = sand.u32 %s68, 1
        %s180 = sand.u32 %s68, 1
        %s181 = smul.addr %s180, 16
        %s182 = scalar_lea.vmem [#allocation3], %s181
        %v184 = vld [vmem:[%s0] sm:$0xf]
        %v185 = vld [vmem:[%s165] sm:$0xf]
        %v186 = vld [vmem:[%s165 + $0x4] sm:$0xf]
        %v189 = vunpack.c.l.b16 %v185
        %v190 = vunpack.c.l.b16 %v186
        %v191 = vpack.c.b16 %v190, %v189
        %vm193 = vcmask 130048
        %v195 = vsel %vm193, %v184, 0
        %197 = vmatprep.subr.bf16.mxu0 0
        %198 = vmatpush1.bf16.msra.mxu0 %v191
        %199 = vmatprep.subr.bf16.mxu0 0
        %200 = vmatpush1.bf16.msra.mxu0 0
        %201 = vmatprep.subr.bf16.mxu0 0
        %202 = vmatpush1.bf16.msra.mxu0 0
        %203 = vmatprep.subr.bf16.mxu0 0
        %204 = vmatpush1.bf16.msra.mxu0 0
        %205 = vmatprep.subr.bf16.mxu0 0
        %206 = vmatpush1.bf16.msra.mxu0 0
        %207 = vmatprep.subr.bf16.mxu0 0
        %208 = vmatpush1.bf16.msra.mxu0 0
        %209 = vmatprep.subr.bf16.mxu0 0
        %210 = vmatpush1.bf16.msra.mxu0 0
        %211 = vmatprep.subr.bf16.mxu0 0
        %212 = vmatpush1.bf16.msra.mxu0 0
        %213 = vmatprep.subr.bf16.mxu0 0
        %214 = vmatpush1.bf16.msra.mxu0 0
        %215 = vmatprep.subr.bf16.mxu0 0
        %216 = vmatpush1.bf16.msra.mxu0 0
        %217 = vmatprep.subr.bf16.mxu0 0
        %218 = vmatpush1.bf16.msra.mxu0 0
        %219 = vmatprep.subr.bf16.mxu0 0
        %220 = vmatpush1.bf16.msra.mxu0 0
        %221 = vmatprep.subr.bf16.mxu0 0
        %222 = vmatpush1.bf16.msra.mxu0 0
        %223 = vmatprep.subr.bf16.mxu0 0
        %224 = vmatpush1.bf16.msra.mxu0 0
        %225 = vmatprep.subr.bf16.mxu0 0
        %226 = vmatpush1.bf16.msra.mxu0 0
        %227 = vmatprep.subr.bf16.mxu0 0
        %228 = vmatpush1.bf16.msra.mxu0 0
        %229 = vmatprep.mubr.bf16.mxu0 0
        %230 = vmatmul.mubr.bf16.gmra.mrb[0].mxu0 %v195
        %v231 = vpop.f32.mrb[0].mxu0
        %v232 = vadd.f32 0.0, %v231
        %v233 = vpop.f32.mrb[0].mxu0
        %v234 = vpop.f32.mrb[0].mxu0
        %v235 = vpop.f32.mrb[0].mxu0
        %236 = vdwg.mxu0
        %v237 = vrot.slane %v232, 4
        %v238 = vadd.f32 %v232, %v237
        %v239 = vrot.slane %v238, 2
        %v240 = vadd.f32 %v238, %v239
        %v241 = vrot.slane %v240, 1
        %v242 = vadd.f32 %v240, %v241
        %v243 = vmul.f32 %v242, 0.125
        %v244 = vsub.f32 %v232, %v243
        %v245 = vmul.f32 %v244, %v244
        %v246 = vrot.slane %v245, 4
        %v247 = vadd.f32 %v245, %v246
        %v248 = vrot.slane %v247, 2
        %v249 = vadd.f32 %v247, %v248
        %v250 = vrot.slane %v249, 1
        %v251 = vadd.f32 %v249, %v250
        %v252 = vmul.f32 %v251, 0.125
        %v253 = vadd.f32 %v252, 1e-05
        %v254 = vrsqrt.pop %v253
        %v255 = vmul.f32 %v244, %v254
        %v256 = vmul.f32 %v255, 0.5
        %v257 = vadd.f32 %v256, 0.0
        %vm258 = vcmp.ge.f32.partialorder %v257, 1.0
        %v259 = vsel %vm258, 1, 0
        %v260 = vcvt.s32.f32 %v259
        %v261 = vsel %vm258, 0.0, %v257
        %v262 = vsub.f32 %v255, %v261
        %v263 = vmul.f32 %v262, 0.5
        %v264 = vadd.f32 %v261, %v263
        %vm265 = vcmp.ge.f32.partialorder %v264, 1.0
        %v266 = vsel %vm265, 1, 0
        %v267 = vcvt.s32.f32 %v266
        %v268 = vsel %vm265, 0.0, %v264
        %v269 = vsub.f32 %v255, %v268
        %v270 = vmul.f32 %v269, 0.5
        %v271 = vadd.f32 %v268, %v270
        %vm272 = vcmp.ge.f32.partialorder %v271, 1.0
        %v273 = vsel %vm272, 1, 0
        %v274 = vcvt.s32.f32 %v273
        %v275 = vsel %vm272, 0.0, %v271
        %v276 = vsub.f32 %v255, %v275
        %v277 = vmul.f32 %v276, 0.5
        %v278 = vadd.f32 %v275, %v277
        %vm279 = vcmp.ge.f32.partialorder %v278, 1.0
        %v280 = vsel %vm279, 1, 0
        %v281 = vcvt.s32.f32 %v280
        %v282 = vpack.c.bf16 %v267, %v260
        %v283 = vpack.c.bf16 %v281, %v274
        %v286 = vunpack.c.l.b16 %v282
        %v287 = vunpack.c.h.b16 %v282
        %v288 = vunpack.c.l.b16 %v283
        %v289 = vunpack.c.h.b16 %v283
        %v290 = vpack.c.b16 %v286, %v286
        %v291 = vpack.c.b16 %v287, %v287
        %v292 = vpack.c.b16 %v288, %v288
        %v293 = vpack.c.b16 %v289, %v289
        %298 = vst [vmem:[%s182] sm:$0xf] %v290
        %299 = vst [vmem:[%s182 + $0x4] sm:$0xf] %v291
        %300 = vst [vmem:[%s182 + $0x8] sm:$0xf] %v292
        %301 = vst [vmem:[%s182 + $0xc] sm:$0xf] %v293
        %s302 = sand.u32 %s68, 1
        %s303 = sand.u32 %s68, 1
        %s304 = smul.addr %s303, 16
        %s305 = scalar_lea.vmem [#allocation3], %s304
        // Predicated region
        $region70: #{ispikformer_forward.1} parent=64 // pred_check
          %p306 = pneg %p78
        $region71: #{ispikformer_forward.1} parent=64 // pred_check_branch
          %308 = sbr.rel (%p306) target = $region73
        $region72: #{ispikformer_forward.1} parent=64 // pred_region
          %s309 = smul.addr %s13, 4
          %s310 = scalar_lea.vmem %s2, %s309
          // Predicated region
          $region74: #{ispikformer_forward.1} parent=72 // pred_check
            _
          $region75: #{ispikformer_forward.1} parent=72 // pred_check_branch
            %312 = sbr.rel (0) target = $region77
          $region76: #{ispikformer_forward.1} parent=72 // pred_region
            // Predicated region
            $region78: #{ispikformer_forward.1} parent=76 // pred_check
              _
            $region79: #{ispikformer_forward.1} parent=76 // pred_check_branch
              %314 = sbr.rel target = $region81
            $region80: #{ispikformer_forward.1} parent=76 // pred_region
              // Predicated region
              $region93: #{ispikformer_forward.1} parent=80 // pred_check
                _
              $region94: #{ispikformer_forward.1} parent=80 // pred_check_branch
                %335 = sbr.rel (0) target = $region96
              $region95: #{ispikformer_forward.1} parent=80 // pred_region
                loop: start=0, step=1, limit=1
                $region97: #{ispikformer_forward.1} parent=95 // loop_pre_header
                  _
                $region98: #{ispikformer_forward.1} parent=95 // loop_header
                  %s337 = sphi 0, %s341
                  %p338 = scmp.ge.s32.totalorder %s337, 1
                  %s342 = sphi %s305, %s305
                  %s343 = sphi %s310, %s310
                $region99: #{ispikformer_forward.1} parent=95 // loop_header_branch
                  %340 = sbr.rel (%p338) target = $region103
                $region100: #{ispikformer_forward.1} parent=95 // loop_body
                  _
                $region101: #{ispikformer_forward.1} parent=95 // loop_footer
                  %s341 = sadd.s32 1, %s337
                $region102: #{ispikformer_forward.1} parent=95 // loop_footer_branch
                  %336 = sbr.rel target = $region98
                $region103: #{ispikformer_forward.1} parent=95 // loop_exit
                  _
                loop: start=0, step=1, limit=1
                $region104: #{ispikformer_forward.1} parent=95 // loop_pre_header
                  _
                $region105: #{ispikformer_forward.1} parent=95 // loop_header
                  %s346 = sphi 0, %s350
                  %p347 = scmp.ge.s32.totalorder %s346, 1
                  %s351 = sphi %s305, %s305
                  %s352 = sphi %s310, %s310
                $region106: #{ispikformer_forward.1} parent=95 // loop_header_branch
                  %349 = sbr.rel (%p347) target = $region110
                $region107: #{ispikformer_forward.1} parent=95 // loop_body
                  %v353 = vld [vmem:[%s351] sm:$0xf]
                  %354 = vst [vmem:[%s352] sm:$0xf] %v353
                  %v355 = vld [vmem:[%s351 + $0x4] sm:$0xf]
                  %356 = vst [vmem:[%s352 + $0x8] sm:$0xf] %v355
                  %v357 = vld [vmem:[%s351 + $0x8] sm:$0xf]
                  %358 = vst [vmem:[%s352 + $0x10] sm:$0xf] %v357
                  %v359 = vld [vmem:[%s351 + $0xc] sm:$0xf]
                  %360 = vst [vmem:[%s352 + $0x18] sm:$0xf] %v359
                $region108: #{ispikformer_forward.1} parent=95 // loop_footer
                  %s350 = sadd.s32 1, %s346
                $region109: #{ispikformer_forward.1} parent=95 // loop_footer_branch
                  %345 = sbr.rel target = $region105
                $region110: #{ispikformer_forward.1} parent=95 // loop_exit
                  _
              $region96: #{ispikformer_forward.1} parent=80 // pred_fallthru
                _
            $region81: #{ispikformer_forward.1} parent=76 // pred_fallthru
              _
            // Predicated region
            $region82: #{ispikformer_forward.1} parent=76 // pred_check
              _
            $region83: #{ispikformer_forward.1} parent=76 // pred_check_branch
              %316 = sbr.rel (0) target = $region85
            $region84: #{ispikformer_forward.1} parent=76 // pred_region
              loop: start=0, step=1, limit=1
              $region86: #{ispikformer_forward.1} parent=84 // loop_pre_header
                _
              $region87: #{ispikformer_forward.1} parent=84 // loop_header
                %s319 = sphi 0, %s323
                %p320 = scmp.ge.s32.totalorder %s319, 1
                %s324 = sphi %s305, %s305
                %s325 = sphi %s310, %s310
              $region88: #{ispikformer_forward.1} parent=84 // loop_header_branch
                %322 = sbr.rel (%p320) target = $region92
              $region89: #{ispikformer_forward.1} parent=84 // loop_body
                %v326 = vld [vmem:[%s324] sm:$0xf]
                %327 = vst [vmem:[%s325] sm:$0xf] %v326
                %v328 = vld [vmem:[%s324 + $0x4] sm:$0xf]
                %329 = vst [vmem:[%s325 + $0x8] sm:$0xf] %v328
                %v330 = vld [vmem:[%s324 + $0x8] sm:$0xf]
                %331 = vst [vmem:[%s325 + $0x10] sm:$0xf] %v330
                %v332 = vld [vmem:[%s324 + $0xc] sm:$0xf]
                %333 = vst [vmem:[%s325 + $0x18] sm:$0xf] %v332
              $region90: #{ispikformer_forward.1} parent=84 // loop_footer
                %s323 = sadd.s32 1, %s319
              $region91: #{ispikformer_forward.1} parent=84 // loop_footer_branch
                %318 = sbr.rel target = $region87
              $region92: #{ispikformer_forward.1} parent=84 // loop_exit
                _
            $region85: #{ispikformer_forward.1} parent=76 // pred_fallthru
              _
          $region77: #{ispikformer_forward.1} parent=72 // pred_fallthru
            _
          %361 = vnop
        $region73: #{ispikformer_forward.1} parent=64 // pred_fallthru
          _
      $region65: #{ispikformer_forward.1} parent=5 // pred_fallthru
        _
      %p362 = scmp.le.s32.totalorder 2, %s8
      // Predicated region
      $region111: #{ispikformer_forward.1} parent=5 // pred_check
        %p363 = pneg %p362
      $region112: #{ispikformer_forward.1} parent=5 // pred_check_branch
        %365 = sbr.rel (%p363) target = $region114
      $region113: #{ispikformer_forward.1} parent=5 // pred_region
        %s366 = ssub.s32 %s8, 2
        // Predicated region
        $region115: #{ispikformer_forward.1} parent=113 // pred_check
          %p367 = pneg %p84
        $region116: #{ispikformer_forward.1} parent=113 // pred_check_branch
          %369 = sbr.rel (%p367) target = $region118
        $region117: #{ispikformer_forward.1} parent=113 // pred_region
          %s370 = sand.u32 %s69, 1
          %s371 = sand.u32 %s69, 1
          %s372 = smul.addr %s371, 16
          %s373 = scalar_lea.vmem [#allocation3], %s372
        $region118: #{ispikformer_forward.1} parent=113 // pred_fallthru
          _
      $region114: #{ispikformer_forward.1} parent=5 // pred_fallthru
        _
    $region6: #{ispikformer_forward.1} parent=1 // loop_footer
      %s12 = sadd.s32 1, %s8
    $region7: #{ispikformer_forward.1} parent=1 // loop_footer_branch
      %7 = sbr.rel target = $region3
    $region8: #{ispikformer_forward.1} parent=1 // loop_exit
      _

</llo_original>
